<compile_context>
chip_gen: v5e
topology: v5e:2x2
jax: 0.10.0
libtpu: 0.0.40
codegen_flags: <defaults>
</compile_context>

<pallas_src>
import math

import numpy as np
import jax
import jax.numpy as jnp
from jax.experimental import pallas as pl
from jax.experimental.pallas import tpu as pltpu

MiB = 1024 * 1024


def _itemsize(dtype):
    return np.dtype(dtype).itemsize


def _vmem_capacity_bytes():
    try:
        return int(pltpu.get_tpu_info().vmem_capacity_bytes)
    except Exception:
        return 64 * MiB          # conservative fallback (v7x per-TC VMEM)


# ----------------------------------------------------------------------------
# Kernels
# ----------------------------------------------------------------------------
def folded_linear_kernel(x_ref, w_ref, b_ref, o_ref, acc_ref):
    """One (tm, tn) tile of out = x @ W_eff + b, with K (Din) split on axis 2."""
    k = pl.program_id(2)

    @pl.when(k == 0)
    def _():
        acc_ref[...] = jnp.zeros_like(acc_ref)

    x = x_ref[...].astype(w_ref.dtype)          # in-kernel cast: no wrapper pass
    acc_ref[...] += jnp.dot(x, w_ref[...], preferred_element_type=jnp.float32)

    @pl.when(k == pl.num_programs(2) - 1)
    def _():
        o_ref[...] = (acc_ref[...] + b_ref[...]).astype(o_ref.dtype)


def lora_fused_kernel(x_ref, w_org_ref, b_ref, lx_ref, w_up_ref, o_ref, acc_ref):
    """out = x @ W_org + b + lx @ (scale*mult*W_up); lx = x @ W_down hoisted to XLA."""
    k = pl.program_id(2)

    @pl.when(k == 0)
    def _():
        acc_ref[...] = jnp.zeros_like(acc_ref)

    x = x_ref[...].astype(w_org_ref.dtype)
    acc_ref[...] += jnp.dot(x, w_org_ref[...], preferred_element_type=jnp.float32)

    @pl.when(k == pl.num_programs(2) - 1)
    def _():
        lora = jnp.dot(lx_ref[...], w_up_ref[...], preferred_element_type=jnp.float32)
        o_ref[...] = (acc_ref[...] + lora + b_ref[...]).astype(o_ref.dtype)


# ----------------------------------------------------------------------------
# One-time (load-time) weight preparation -- hoisted out of the forward trace
# ----------------------------------------------------------------------------
def fold_lora_weights(w_org_t, b_org, w_down_t, w_up_t, *, scale, multiplier,
                      weight_dtype=jnp.bfloat16):
    """W_eff = W_org + W_down @ (scale*mult*W_up), folded once at load time.

    NOTE: casting W_eff to bf16 can quantize a very small LoRA delta; pass
    weight_dtype=jnp.float32 (or use the fused path) if the delta matters.
    """
    w_up_scaled = (float(scale) * float(multiplier)) * w_up_t.astype(jnp.float32)
    w_eff = (w_org_t.astype(jnp.float32)
             + jnp.dot(w_down_t.astype(jnp.float32), w_up_scaled))
    return {"w_eff": w_eff.astype(weight_dtype),
            "bias": b_org.astype(jnp.float32).reshape(1, -1)}


def prepare_fused_weights(w_org_t, b_org, w_down_t, w_up_t, *, scale, multiplier,
                          weight_dtype=jnp.bfloat16):
    """Prep for the explicit low-rank path (keeps W_org untouched)."""
    w_up_scaled = (float(scale) * float(multiplier)) * w_up_t.astype(jnp.float32)
    return {"w_org": w_org_t.astype(weight_dtype),
            "w_down": w_down_t,                       # tiny XLA down-projection
            "w_up": w_up_scaled.astype(weight_dtype),
            "bias": b_org.astype(jnp.float32).reshape(1, -1)}


# ----------------------------------------------------------------------------
# Tiling
# ----------------------------------------------------------------------------
def _pick_tiles(M, Din, Dout, x_isz, w_isz, out_isz, tm, tn, tk, vmem_budget):
    # Lane-dense tiles; full-extent blocks for small dims (always legal).
    tm_eff = M if M <= tm else tm                 # tm is a multiple of 8
    tn_eff = Dout if Dout <= tn else tn           # tn is a multiple of 128

    def vmem_bytes(tk_):
        return (2 * tm_eff * tk_ * x_isz          # x block, double-buffered
                + 2 * tk_ * tn_eff * w_isz        # weight block, double-buffered
                + 2 * tm_eff * tn_eff * out_isz   # output block, double-buffered
                + 2 * tn_eff * 4                  # bias
                + tm_eff * tn_eff * 4)            # f32 accumulator scratch

    if tk is None:
        tk = Din
        if vmem_bytes(Din) > vmem_budget:
            # K (Din) split: tk must divide Din and keep the lane dim a
            # multiple of 128 (a ragged K block would accumulate garbage).
            best = None
            for cand in range(128, Din, 128):
                if Din % cand == 0 and vmem_bytes(cand) <= vmem_budget:
                    best = cand
            if best is not None:
                tk = best
            # TODO(synk): ragged-K split (Din with no 128-multiple divisor)
            # needs in-kernel masking of the last K block; fall back to tk=Din.
    else:
        assert Din % tk == 0 and (tk == Din or tk % 128 == 0), \
            "tk must divide Din and be a multiple of 128 (or equal Din)"
    return tm_eff, tn_eff, tk


# ----------------------------------------------------------------------------
# Forward
# ----------------------------------------------------------------------------
def lora_module_forward(x, params, *, fused=False, tm=256, tn=None, tk=None,
                        out_dtype=None):
    """LoRAModule.forward (Linear branch, eval mode, scalar multiplier).

    x:      (B, S, in_features)
    params: fold_lora_weights(...) output (fused=False) or
            prepare_fused_weights(...) output (fused=True).
    """
    B, S, Din = x.shape
    bias = params["bias"]
    Dout = bias.shape[1]
    M = B * S
    out_dtype = x.dtype if out_dtype is None else out_dtype

    vmem_cap = _vmem_capacity_bytes()
    # v5e/v6e (128 MiB VMEM): ~100 MiB limit + wider tiles; v7x (64 MiB): ~50 MiB.
    vmem_limit = min(100 * MiB, int(vmem_cap * 0.78))
    if tn is None:
        tn = 1024 if vmem_cap >= 100 * MiB else 512

    w_main = params["w_eff"] if not fused else params["w_org"]
    w_isz = _itemsize(w_main.dtype)
    tm_eff, tn_eff, tk_eff = _pick_tiles(
        M, Din, Dout, _itemsize(x.dtype), w_isz, _itemsize(out_dtype),
        tm, tn, tk, int(vmem_limit * 0.9))

    nM = pl.cdiv(M, tm_eff)
    nN = pl.cdiv(Dout, tn_eff)
    nK = Din // tk_eff

    # Keep the larger operand VMEM-resident across the inner axis: its block
    # index then depends only on the outer grid axis, so Pallas skips the
    # re-DMA between consecutive steps.  N-outer also lets megacore shard the
    # weight read across TensorCores instead of duplicating it.
    n_outer = (Din * Dout * w_isz) >= (M * Din * _itemsize(x.dtype))
    if n_outer:
        grid = (nN, nM, nK)
        x_map = lambda j, i, k: (i, k)
        w_map = lambda j, i, k: (k, j)
        col_map = lambda j, i, k: (0, j)     # bias / w_up  (depends on N only)
        row_map = lambda j, i, k: (i, 0)     # lx           (depends on M only)
        o_map = lambda j, i, k: (i, j)
    else:
        grid = (nM, nN, nK)
        x_map = lambda i, j, k: (i, k)
        w_map = lambda i, j, k: (k, j)
        col_map = lambda i, j, k: (0, j)
        row_map = lambda i, j, k: (i, 0)
        o_map = lambda i, j, k: (i, j)

    x2 = x.reshape(M, Din)                   # no pad / cast HBM passes per call

    x_spec = pl.BlockSpec((tm_eff, tk_eff), x_map)
    w_spec = pl.BlockSpec((tk_eff, tn_eff), w_map)
    b_spec = pl.BlockSpec((1, tn_eff), col_map)
    out_spec = pl.BlockSpec((tm_eff, tn_eff), o_map)
    out_shape = jax.ShapeDtypeStruct((M, Dout), out_dtype)
    scratch = [pltpu.VMEM((tm_eff, tn_eff), jnp.float32)]

    compiler_params = pltpu.CompilerParams(
        # Outer axis "parallel" (megacore sharding); inner M/N axis "arbitrary"
        # so the resident operand is not split across cores; K is the reduction.
        dimension_semantics=("parallel", "arbitrary", "arbitrary"),
        vmem_limit_bytes=int(vmem_limit))

    # HBM traffic matching the residency model above (advisory for XLA).
    w_passes = 1 if (n_outer and nK == 1) else nM
    x_passes = nN if (n_outer or nK > 1) else 1
    base_bytes = (w_passes * Din * Dout * w_isz
                  + x_passes * M * Din * _itemsize(x.dtype)
                  + Dout * 4 + M * Dout * _itemsize(out_dtype))

    if not fused:
        cost = pl.CostEstimate(flops=2 * M * Din * Dout, transcendentals=0,
                               bytes_accessed=int(base_bytes))
        out2 = pl.pallas_call(
            folded_linear_kernel,
            out_shape=out_shape,
            grid=grid,
            in_specs=[x_spec, w_spec, b_spec],
            out_specs=out_spec,
            scratch_shapes=scratch,
            compiler_params=compiler_params,
            cost_estimate=cost,
        )(x2, params["w_eff"], bias)
    else:
        w_up = params["w_up"]
        r = w_up.shape[0]
        # Down-projection hoisted out of the kernel: it only depends on the M
        # tile, so recomputing it per N tile wasted a full K-pass of MXU time.
        lx = jnp.dot(x2, params["w_down"],
                     preferred_element_type=jnp.float32).astype(w_up.dtype)
        cost = pl.CostEstimate(
            flops=2 * M * Din * Dout + 2 * M * r * Dout, transcendentals=0,
            bytes_accessed=int(base_bytes + r * Dout * _itemsize(w_up.dtype)
                               + nN * M * r * _itemsize(w_up.dtype)))
        out2 = pl.pallas_call(
            lora_fused_kernel,
            out_shape=out_shape,
            grid=grid,
            in_specs=[x_spec, w_spec, b_spec,
                      pl.BlockSpec((tm_eff, r), row_map),
                      pl.BlockSpec((r, tn_eff), col_map)],
            out_specs=out_spec,
            scratch_shapes=scratch,
            compiler_params=compiler_params,
            cost_estimate=cost,
        )(x2, params["w_org"], bias, lx, w_up)

    # TODO(synk): per-batch list multiplier (get_multiplier), is_normalizing
    # rescaling, and training-mode dropouts are not implemented (eval forward).
    return out2.reshape(B, S, Dout)


# ----------------------------------------------------------------------------
# Self-test
# ----------------------------------------------------------------------------
if __name__ == "__main__":
    lora_dim, alpha, multiplier = 4, 1.0, 1.0
    scale = alpha / lora_dim

    def make_case(case_key, B, S, Din, Dout):
        k_x, k_worg, k_b, k_down, k_up = jax.random.split(case_key, 5)
        x = jax.random.normal(k_x, (B, S, Din), dtype=jnp.float32)
        # Original (frozen) Linear parameters -- stored transposed (in, out).
        w_org_t = jax.random.normal(k_worg, (Din, Dout), dtype=jnp.float32) * 0.05
        b_org = jax.random.normal(k_b, (Dout,), dtype=jnp.float32) * 0.05
        # lora_down: kaiming_uniform_(a=sqrt(5)); bound = sqrt(3)*gain/sqrt(fan_in)
        gain = math.sqrt(2.0 / (1.0 + 5.0))
        bound = math.sqrt(3.0) * gain / math.sqrt(Din)
        w_down_t = jax.random.uniform(k_down, (Din, lora_dim), minval=-bound,
                                      maxval=bound, dtype=jnp.float32)
        # __init__ zero-inits lora_up; use small nonzero values so the LoRA
        # path actually contributes (a trained lora_up would be nonzero).
        w_up_t = jax.random.normal(k_up, (lora_dim, Dout), dtype=jnp.float32) * 0.1
        return x, w_org_t, b_org, w_down_t, w_up_t

    def reference(x, w_org_t, b_org, w_down_t, w_up_t):
        B, S, Din = x.shape
        x2 = x.reshape(B * S, Din)
        ref = (x2 @ w_org_t + b_org[None, :]
               + (scale * multiplier) * ((x2 @ w_down_t) @ w_up_t))
        return ref.reshape(B, S, -1)

    key = jax.random.PRNGKey(0)
    keys = jax.random.split(key, 3)
    # (B, S, Din, Dout, tm, tn, tk): single tile / ragged M+N tiles / forced K split.
    cases = [(2, 8, 32, 32, 256, None, None),
             (5, 8, 32, 160, 16, 128, None),
             (2, 8, 256, 128, 256, None, 128)]

    for case_key, (B, S, Din, Dout, tm, tn, tk) in zip(keys, cases):
        x, w_org_t, b_org, w_down_t, w_up_t = make_case(case_key, B, S, Din, Dout)

        # Load-time weight prep (hoisted out of the per-forward trace).
        folded_p = fold_lora_weights(w_org_t, b_org, w_down_t, w_up_t,
                                     scale=scale, multiplier=multiplier)
        fused_p = prepare_fused_weights(w_org_t, b_org, w_down_t, w_up_t,
                                        scale=scale, multiplier=multiplier)

        out_folded = lora_module_forward(x, folded_p, fused=False, tm=tm, tn=tn, tk=tk)
        out_fused = lora_module_forward(x, fused_p, fused=True, tm=tm, tn=tn, tk=tk)
        out_folded, out_fused = jax.block_until_ready((out_folded, out_fused))

        ref = reference(x, w_org_t, b_org, w_down_t, w_up_t)
        assert out_folded.shape == (B, S, Dout)
        assert out_fused.shape == (B, S, Dout)
        assert jnp.allclose(out_folded, ref, atol=3e-2, rtol=3e-2), (B, S, Din, Dout)
        assert jnp.allclose(out_fused, ref, atol=3e-2, rtol=3e-2), (B, S, Din, Dout)

    print("KERNEL_OK")
</pallas_src>

<mosaic_0001>
module attributes {stable_mosaic.version = 11 : i64} {
  func.func @folded_linear_kernel(%arg0: i32, %arg1: i32, %arg2: i32, %arg3: memref<16x32xf32, #tpu.memory_space<vmem>>, %arg4: memref<32x32xbf16, #tpu.memory_space<vmem>>, %arg5: memref<1x32xf32, #tpu.memory_space<vmem>>, %arg6: memref<16x32xf32, #tpu.memory_space<vmem>>, %arg7: memref<16x32xf32, #tpu.memory_space<vmem>>) attributes {dimension_semantics = [#tpu.dimension_semantics<parallel>, #tpu.dimension_semantics<arbitrary>, #tpu.dimension_semantics<arbitrary>], iteration_bounds = array<i64: 1, 1, 1>, scalar_prefetch = 0 : i64, scratch_operands = 1 : i64, tpu.core_type = #tpu.core_type<tc>, window_params = [{transform_indices = @transform_0, window_bounds = array<i64: 16, 32>}, {transform_indices = @transform_1, window_bounds = array<i64: 32, 32>}, {transform_indices = @transform_2, window_bounds = array<i64: 1, 32>}, {transform_indices = @transform_3, window_bounds = array<i64: 16, 32>}]} {
    %c0_i32 = arith.constant 0 : i32
    %0 = arith.cmpi eq, %arg2, %c0_i32 : i32
    %1 = arith.extui %0 : i1 to i32
    %c0_i32_0 = arith.constant 0 : i32
    %2 = arith.cmpi ne, %1, %c0_i32_0 : i32
    scf.if %2 {
      %cst_10 = arith.constant 0.000000e+00 : f32
      %13 = vector.broadcast %cst_10 : f32 to vector<16x32xf32>
      %c0_11 = arith.constant 0 : index
      %c0_12 = arith.constant 0 : index
      %14 = vector.load %arg7[%c0_11, %c0_12] : memref<16x32xf32, #tpu.memory_space<vmem>>, vector<16x32xf32>
      tpu.vector_store %arg7[%c0_11, %c0_12], %13 {strides = array<i32>} : memref<16x32xf32, #tpu.memory_space<vmem>>, vector<16x32xf32>,
    } else {
    }
    %c0 = arith.constant 0 : index
    %c0_1 = arith.constant 0 : index
    %3 = vector.load %arg3[%c0, %c0_1] : memref<16x32xf32, #tpu.memory_space<vmem>>, vector<16x32xf32>
    %4 = arith.truncf %3 : vector<16x32xf32> to vector<16x32xbf16>
    %c0_2 = arith.constant 0 : index
    %c0_3 = arith.constant 0 : index
    %5 = vector.load %arg7[%c0_2, %c0_3] : memref<16x32xf32, #tpu.memory_space<vmem>>, vector<16x32xf32>
    %c0_4 = arith.constant 0 : index
    %c0_5 = arith.constant 0 : index
    %6 = vector.load %arg4[%c0_4, %c0_5] : memref<32x32xbf16, #tpu.memory_space<vmem>>, vector<32x32xbf16>
    %cst = arith.constant dense<0.000000e+00> : vector<16x32xf32>
    %7 = tpu.matmul %4, %6, %cst {dimension_numbers = #tpu.dot_dimension_numbers<[1], [0], [0], [1], [0, 0, 1, 1], [], []>} : vector<16x32xbf16>, vector<32x32xbf16>, vector<16x32xf32> -> vector<16x32xf32>
    %8 = arith.addf %5, %7 : vector<16x32xf32>
    %c0_6 = arith.constant 0 : index
    %c0_7 = arith.constant 0 : index
    %9 = vector.load %arg7[%c0_6, %c0_7] : memref<16x32xf32, #tpu.memory_space<vmem>>, vector<16x32xf32>
    tpu.vector_store %arg7[%c0_6, %c0_7], %8 {strides = array<i32>} : memref<16x32xf32, #tpu.memory_space<vmem>>, vector<16x32xf32>,
    %c0_i32_8 = arith.constant 0 : i32
    %10 = arith.cmpi eq, %arg2, %c0_i32_8 : i32
    %11 = arith.extui %10 : i1 to i32
    %c0_i32_9 = arith.constant 0 : i32
    %12 = arith.cmpi ne, %11, %c0_i32_9 : i32
    scf.if %12 {
      %c0_10 = arith.constant 0 : index
      %c0_11 = arith.constant 0 : index
      %13 = vector.load %arg7[%c0_10, %c0_11] : memref<16x32xf32, #tpu.memory_space<vmem>>, vector<16x32xf32>
      %c0_12 = arith.constant 0 : index
      %c0_13 = arith.constant 0 : index
      %14 = vector.load %arg5[%c0_12, %c0_13] : memref<1x32xf32, #tpu.memory_space<vmem>>, vector<1x32xf32>
      %15 = vector.broadcast %14 : vector<1x32xf32> to vector<16x32xf32>
      %16 = arith.addf %13, %15 : vector<16x32xf32>
      %c0_14 = arith.constant 0 : index
      %c0_15 = arith.constant 0 : index
      %17 = vector.load %arg6[%c0_14, %c0_15] : memref<16x32xf32, #tpu.memory_space<vmem>>, vector<16x32xf32>
      tpu.vector_store %arg6[%c0_14, %c0_15], %16 {strides = array<i32>} : memref<16x32xf32, #tpu.memory_space<vmem>>, vector<16x32xf32>,
    } else {
    }
    return
  }
  func.func @transform_0(%arg0: i32, %arg1: i32, %arg2: i32) -> (i32, i32) {
    %c0_i32 = arith.constant 0 : i32
    return %arg1, %arg2 : i32, i32
  }
  func.func @transform_1(%arg0: i32, %arg1: i32, %arg2: i32) -> (i32, i32) {
    %c0_i32 = arith.constant 0 : i32
    return %arg2, %arg0 : i32, i32
  }
  func.func @transform_2(%arg0: i32, %arg1: i32, %arg2: i32) -> (i32, i32) {
    %c0_i32 = arith.constant 0 : i32
    %c0_i32_0 = arith.constant 0 : i32
    return %c0_i32, %arg0 : i32, i32
  }
  func.func @transform_3(%arg0: i32, %arg1: i32, %arg2: i32) -> (i32, i32) {
    %c0_i32 = arith.constant 0 : i32
    return %arg1, %arg0 : i32, i32
  }
}

</mosaic_0001>

<llo_original>
// kernel: tpu_custom_call.1
$region0: #{tpu_custom_call.1}
  #allocation0 [shape = 'u32[]', space=smem, size = 0x4, offset = 0x4, fixed_abs, tag = 'smem constant byte address 0x4 - core index']
  #allocation1 [shape = 'u32[72,128]{1,0:T(1,128)}', space=vmem, size = 0x9000, scoped, tag = 'internal scratch']
  #allocation2 [shape = 'f32[16,32]{1,0:T(8,128)}', space=vmem, size = 0x2000, scoped, tag = 'scratch operand']
  %s0 = inlined_call_operand.hbm [shape: f32[16,32], index: 0, kind: input, shape index: {}]
  %s1 = inlined_call_operand.hbm [shape: bf16[32,32], index: 1, kind: input, shape index: {}]
  %s2 = inlined_call_operand.vmem [shape: f32[1,32], index: 2, kind: input, shape index: {}]
  %s3 = inlined_call_operand.hbm [shape: f32[16,32], index: 3, kind: output, shape index: {}]
  %s4 = sld [smem:[#allocation0]]
  $region38: #{tpu_custom_call.1} parent=0
    _
  %s6 = ssub.s32 1, %s4
  %s7 = scalar_select 0, %s6, %s4
  $region1: #{tpu_custom_call.1} parent=0
    #allocation3 [shape = 'u8[8192]{0}', space=vmem, size = 0x2000, scoped, tag = 'input window, operand 0, single buffered']
    #allocation4 [shape = 's32[1]{0}', space=sflag, size = 0x4, scoped, tag = 'scoped memory for tpu_custom_call.1']
    #allocation5 [shape = 's32[1]{0}', space=sflag, size = 0x4, scoped, tag = 'scoped memory for tpu_custom_call.1']
    #allocation6 [shape = 'u8[8192]{0}', space=vmem, size = 0x2000, scoped, tag = 'input window, operand 1, single buffered']
    #allocation7 [shape = 's32[1]{0}', space=sflag, size = 0x4, scoped, tag = 'scoped memory for tpu_custom_call.1']
    #allocation8 [shape = 'u8[8192]{0}', space=vmem, size = 0x2000, scoped, tag = 'output window, operand 0, single buffered']
    %8 = vsyncpa [#allocation4], 0
    %9 = vsyncpa [#allocation7], 0
    %10 = vsyncpa [#allocation5], 0
    // Predicated region
    $region2: #{tpu_custom_call.1} parent=1 // pred_check
      _
    $region3: #{tpu_custom_call.1} parent=1 // pred_check_branch
      %12 = sbr.rel (0) target = $region5
    $region4: #{tpu_custom_call.1} parent=1 // pred_region
      %14 = vsyncadd [#allocation4], 0
      %s15 = sshll.u32 %s0, 4
      %s16 = int_to_ptr.hbm [resolvable:$true] %s15
      %s17 = sshll.u32 [#allocation3], 4
      %s18 = int_to_ptr.vmem [resolvable:$true] %s17
      %23 = dma.hbm_to_vmem [thread:$0]  %s16, 256, %s18, [#allocation4], 128, 128, 8
    $region5: #{tpu_custom_call.1} parent=1 // pred_fallthru
      _
    // Predicated region
    $region6: #{tpu_custom_call.1} parent=1 // pred_check
      _
    $region7: #{tpu_custom_call.1} parent=1 // pred_check_branch
      %25 = sbr.rel (0) target = $region9
    $region8: #{tpu_custom_call.1} parent=1 // pred_region
      %27 = vsyncadd [#allocation7], 0
      %s28 = sshll.u32 %s1, 4
      %s29 = int_to_ptr.hbm [resolvable:$true] %s28
      %s30 = sshll.u32 [#allocation6], 4
      %s31 = int_to_ptr.vmem [resolvable:$true] %s30
      %36 = dma.hbm_to_vmem [thread:$0]  %s29, 256, %s31, [#allocation7], 64, 64, 4
    $region9: #{tpu_custom_call.1} parent=1 // pred_fallthru
      _
    // Predicated region
    $region10: #{tpu_custom_call.1} parent=1 // pred_check
      _
    $region11: #{tpu_custom_call.1} parent=1 // pred_check_branch
      %38 = sbr.rel (0) target = $region13
    $region12: #{tpu_custom_call.1} parent=1 // pred_region
      _
    $region13: #{tpu_custom_call.1} parent=1 // pred_fallthru
      _
    // Predicated region
    $region14: #{tpu_custom_call.1} parent=1 // pred_check
      _
    $region15: #{tpu_custom_call.1} parent=1 // pred_check_branch
      %40 = sbr.rel (0) target = $region17
    $region16: #{tpu_custom_call.1} parent=1 // pred_region
      %42 = dma.done [#allocation4], 256
    $region17: #{tpu_custom_call.1} parent=1 // pred_fallthru
      _
    // Predicated region
    $region18: #{tpu_custom_call.1} parent=1 // pred_check
      _
    $region19: #{tpu_custom_call.1} parent=1 // pred_check_branch
      %44 = sbr.rel (0) target = $region21
    $region20: #{tpu_custom_call.1} parent=1 // pred_region
      %46 = dma.done [#allocation7], 256
    $region21: #{tpu_custom_call.1} parent=1 // pred_fallthru
      _
    %p48 = scmp.eq.s32.totalorder 0, 0
    // Predicated region
    $region22: #{tpu_custom_call.1} parent=1 // pred_check
      %p49 = pneg %p48
    $region23: #{tpu_custom_call.1} parent=1 // pred_check_branch
      %51 = sbr.rel (%p49) target = $region25
    $region24: #{tpu_custom_call.1} parent=1 // pred_region
      %vm52 = vcmask 261120
      %53 = vst.msk [vmem:[#allocation2] sm:$0xff] %vm52, 0.0
      %54 = vst.msk [vmem:[#allocation2 + $0x8] sm:$0xff] %vm52, 0.0
    $region25: #{tpu_custom_call.1} parent=1 // pred_fallthru
      _
    %v55 = vld [vmem:[#allocation3] sm:$0xff]
    %v56 = vld [vmem:[#allocation3 + $0x8] sm:$0xff]
    %v57 = vpack.c.bf16 %v56, %v55
    %v58 = vld [vmem:[#allocation2] sm:$0xff]
    %v59 = vld [vmem:[#allocation2 + $0x8] sm:$0xff]
    %v60 = vld [vmem:[#allocation6] sm:$0xf]
    %v61 = vld [vmem:[#allocation6 + $0x4] sm:$0xf]
    %v62 = vld [vmem:[#allocation6 + $0x8] sm:$0xf]
    %v63 = vld [vmem:[#allocation6 + $0xc] sm:$0xf]
    %v68 = vunpack.c.l.b16 %v60
    %v69 = vunpack.c.l.b16 %v61
    %v70 = vunpack.c.l.b16 %v62
    %v71 = vunpack.c.l.b16 %v63
    %v72 = vpack.c.b16 %v69, %v68
    %v73 = vpack.c.b16 %v71, %v70
    %vm76 = vcmask 261120
    %v78 = vsel %vm76, %v57, 0
    %80 = vmatpush.bf16.msra.mxu0 0
    %81 = vmatpush.bf16.msra.mxu0 0
    %82 = vmatpush.bf16.msra.mxu0 0
    %83 = vmatpush.bf16.msra.mxu0 0
    %84 = vmatpush.bf16.msra.mxu0 0
    %85 = vmatpush.bf16.msra.mxu0 0
    %86 = vmatpush.bf16.msra.mxu0 %v73
    %87 = vmatpush.bf16.msra.mxu0 %v72
    %88 = vmatmul.bf16.gmra.mxu0 %v78
    %v89 = vpop.f32.mrf.mxu0
    %v90 = vadd.f32 0.0, %v89
    %v91 = vpop.f32.mrf.mxu0
    %v92 = vadd.f32 0.0, %v91
    %93 = vdwg.mxu0
    %v94 = vadd.f32 %v58, %v90
    %v95 = vadd.f32 %v59, %v92
    %96 = vst.msk [vmem:[#allocation2] sm:$0xff] %vm76, %v94
    %97 = vst.msk [vmem:[#allocation2 + $0x8] sm:$0xff] %vm76, %v95
    // Predicated region
    $region26: #{tpu_custom_call.1} parent=1 // pred_check
      %p98 = pneg %p48
    $region27: #{tpu_custom_call.1} parent=1 // pred_check_branch
      %100 = sbr.rel (%p98) target = $region29
    $region28: #{tpu_custom_call.1} parent=1 // pred_region
      %v101 = vld [vmem:[#allocation2] sm:$0xff]
      %v102 = vld [vmem:[#allocation2 + $0x8] sm:$0xff]
      %v103 = vld [vmem:[%s2] sm:$0x1]
      %v105 = vperm.slane %v103, 0
      %v107 = vadd.f32 %v101, %v105
      %v108 = vadd.f32 %v102, %v105
      %109 = vst.msk [vmem:[#allocation8] sm:$0xff] %vm76, %v107
      %110 = vst.msk [vmem:[#allocation8 + $0x8] sm:$0xff] %vm76, %v108
    $region29: #{tpu_custom_call.1} parent=1 // pred_fallthru
      _
    // Predicated region
    $region30: #{tpu_custom_call.1} parent=1 // pred_check
      _
    $region31: #{tpu_custom_call.1} parent=1 // pred_check_branch
      %112 = sbr.rel (0) target = $region33
    $region32: #{tpu_custom_call.1} parent=1 // pred_region
      %114 = vsyncadd [#allocation5], 0
      %s115 = sshll.u32 [#allocation8], 4
      %s116 = int_to_ptr.vmem [resolvable:$true] %s115
      %s117 = sshll.u32 %s3, 4
      %s118 = int_to_ptr.hbm [resolvable:$true] %s117
      %123 = dma.vmem_to_hbm [thread:$0]  %s116, 256, %s118, [#allocation5], 128, 128, 8
    $region33: #{tpu_custom_call.1} parent=1 // pred_fallthru
      _
    // Predicated region
    $region34: #{tpu_custom_call.1} parent=1 // pred_check
      _
    $region35: #{tpu_custom_call.1} parent=1 // pred_check_branch
      %125 = sbr.rel (0) target = $region37
    $region36: #{tpu_custom_call.1} parent=1 // pred_region
      %127 = dma.done [#allocation5], 256
    $region37: #{tpu_custom_call.1} parent=1 // pred_fallthru
      _
    %128 = vsyncpa [#allocation4], 1
    %129 = vsyncpa [#allocation7], 1
    %130 = vsyncpa [#allocation5], 1

</llo_original>
